<compile_context>
chip_gen: v6e
topology: v6e:2x2x1
jax: 0.10.0
libtpu: 0.0.40
codegen_flags: <defaults>
</compile_context>

<pallas_src>
import functools

import jax
import jax.numpy as jnp
from jax.experimental import pallas as pl
from jax.experimental.pallas import tpu as pltpu


def _round_up(a: int, m: int) -> int:
    return ((a + m - 1) // m) * m


def _cdiv(a: int, m: int) -> int:
    return (a + m - 1) // m


# ----------------------------------------------------------------------------
# Kernel
# ----------------------------------------------------------------------------
def _mlp2_kernel(x_ref, w0t_ref, b0_ref, w1_ref, b1_ref, w2_ref, b2_ref,
                 w3_ref, b3_ref, out_ref, acc_ref, *,
                 inv_n, valid_lanes, mask_tail):
    ni = pl.program_id(1)

    @pl.when(ni == 0)
    def _init():
        acc_ref[...] = jnp.zeros_like(acc_ref)

    x = x_ref[...]
    if mask_tail:
        # Last N-tile is ragged: zero the lanes past N*3 (OOB reads are
        # unspecified).  Emitted only when N % block_n != 0; VPU has slack.
        lanes = x.shape[1]
        gidx = ni * lanes + jax.lax.broadcasted_iota(jnp.int32, x.shape, 1)
        x = jnp.where(gidx < valid_lanes, x, jnp.zeros_like(x))

    # Streaming partial sum of layer 0 over the points in this tile:
    #   (bb, bn*3) @ (bn*3, L)  ==  sum_{points in tile} (x_point @ W0)
    acc_ref[...] += jnp.dot(x, w0t_ref[...], preferred_element_type=jnp.float32)

    @pl.when(ni == pl.num_programs(1) - 1)
    def _epilogue():
        # mean over points (bias added once, after the mean) + small MLP.
        zm = acc_ref[...] * inv_n + b0_ref[...]                     # (bb, L)
        h = jnp.dot(zm, w1_ref[...],
                    preferred_element_type=jnp.float32) + b1_ref[...]
        h = jnp.maximum(h, 0.0)
        h = jnp.dot(h, w2_ref[...],
                    preferred_element_type=jnp.float32) + b2_ref[...]
        h = jnp.maximum(h, 0.0)
        out_ref[...] = (jnp.dot(h, w3_ref[...],
                                preferred_element_type=jnp.float32)
                        + b3_ref[...]).astype(out_ref.dtype)


# ----------------------------------------------------------------------------
# Tile sizing
# ----------------------------------------------------------------------------
def _pick_block_b(B, requested, itemsize):
    sub = 16 if itemsize < 4 else 8       # sublane packing for bf16/fp8
    bb = 256 if requested is None else requested
    bb = min(bb, B)                        # never stream more rows than exist
    if bb < B:
        # must be a positive multiple of 8 (prefer `sub` for packed dtypes)
        m = sub if (bb // sub) * sub >= 8 else 8
        bb = max(8, (bb // m) * m)
        if bb > B:                          # only possible when B < 8
            bb = B
    # v7x megacore: make sure the "parallel" B axis has >= 2 blocks.
    if B >= 16 and _cdiv(B, bb) < 2:
        half = _round_up(_cdiv(B, 2), sub)
        if half >= B:
            half = _round_up(_cdiv(B, 2), 8)
        if half < B:
            bb = half
    return bb


def _pick_block_n(N, requested, block_b, itemsize, target_bytes=8 << 20):
    if requested is None:
        # ~8 MiB of x per grid step to amortize per-step pipeline overhead.
        bn = max(128, target_bytes // (block_b * 3 * itemsize))
        bn = min(bn, 32768)
    else:
        bn = requested
    bn = min(bn, N)
    if bn < N:
        bn = (bn // 128) * 128             # lane extent bn*3 multiple of 384
        if bn == 0:                         # too small to tile legally
            bn = N                          # -> single full-extent tile
    return bn


# ----------------------------------------------------------------------------
# Wrapper
# ----------------------------------------------------------------------------
def mlp2_forward(x, params, *, block_b=None, block_n=None, compute_dtype=None):
    """x: (B, N, 3).  params: dict of (in,out) weights + (1,out) biases.

    compute_dtype: leave None (default) to stream x in its own dtype.  If x is
      produced upstream in bf16, it is streamed as bf16 with f32 accumulation
      automatically (halves the dominant HBM traffic).  Passing a dtype that
      differs from x.dtype forces a wrapper-side cast, which adds a full extra
      HBM pass over x and is usually a net loss — only do it if you cannot
      change the producer.
    """
    B, N, in_dim = x.shape
    assert in_dim == 3, "MLP2.map_to_latent expects 3 input features"
    latent = params["w0"].shape[1]
    hidden = params["w1"].shape[1]
    out_dim = params["w3"].shape[1]

    stream_dtype = jnp.dtype(x.dtype if compute_dtype is None else compute_dtype)
    if stream_dtype != x.dtype:
        # Discouraged path (extra HBM pass); prefer bf16-at-source.
        x = x.astype(stream_dtype)
    itemsize = stream_dtype.itemsize

    bb = _pick_block_b(B, block_b, itemsize)
    bn = _pick_block_n(N, block_n, bb, itemsize)

    # Lane-dense view of x: pure reshape of a contiguous array — no copy, no
    # padding.  Ragged tails handled in-kernel / by Pallas edge blocks.
    x2d = x.reshape(B, N * 3)

    # Pre-tiled W0 (row i = W0[i % 3]): fuses layer 0 with the point reduction
    # into one K = bn*3 matmul.  Tiny (bn*3*latent elems); under jit with
    # constant params it is hoisted once, not rebuilt per step.
    w0t = jnp.tile(params["w0"].astype(stream_dtype), (bn, 1))

    f32 = jnp.float32
    args = (x2d, w0t,
            params["b0"].astype(f32),
            params["w1"].astype(f32), params["b1"].astype(f32),
            params["w2"].astype(f32), params["b2"].astype(f32),
            params["w3"].astype(f32), params["b3"].astype(f32))

    grid = (_cdiv(B, bb), _cdiv(N, bn))

    def const(shape):
        return pl.BlockSpec(shape, lambda bi, ni: (0,) * len(shape))

    in_specs = [
        pl.BlockSpec((bb, bn * 3), lambda bi, ni: (bi, ni)),
        const((bn * 3, latent)),
        const((1, latent)),
        const((latent, hidden)), const((1, hidden)),
        const((hidden, hidden)), const((1, hidden)),
        const((hidden, out_dim)), const((1, out_dim)),
    ]
    # TODO(synk): out_dim < 128 means a masked (vst.msk) writeback; output is
    # tiny here, so lane-padding the out block isn't worth it yet.
    out_specs = pl.BlockSpec((bb, out_dim), lambda bi, ni: (bi, 0))

    # Explicit VMEM budget: x tile double-buffered + resident weights + acc,
    # with headroom; capped at 48 MiB (safe under v7x's 64 MiB physical VMEM).
    x_tile_bytes = bb * bn * 3 * itemsize
    resident_bytes = (2 * int(w0t.size) * itemsize
                      + 2 * sum(int(a.size) * 4 for a in args[2:])
                      + bb * latent * 4 + 2 * bb * out_dim * 4)
    vmem_limit = int(min(max(2 * x_tile_bytes + resident_bytes + (4 << 20),
                             32 << 20), 48 << 20))

    flops = (2 * B * N * 3 * latent
             + 2 * B * (latent * hidden + hidden * hidden + hidden * out_dim))
    bytes_accessed = int(int(x2d.size) * itemsize
                         + int(w0t.size) * itemsize
                         + sum(int(a.size) * 4 for a in args[2:])
                         + B * out_dim * 4)

    kernel = functools.partial(
        _mlp2_kernel, inv_n=1.0 / float(N), valid_lanes=N * 3,
        mask_tail=bool(N % bn))

    return pl.pallas_call(
        kernel,
        out_shape=jax.ShapeDtypeStruct((B, out_dim), jnp.float32),
        grid=grid,
        in_specs=in_specs,
        out_specs=out_specs,
        scratch_shapes=[pltpu.VMEM((bb, latent), jnp.float32)],
        compiler_params=pltpu.CompilerParams(
            dimension_semantics=("parallel", "arbitrary"),
            vmem_limit_bytes=vmem_limit),
        cost_estimate=pl.CostEstimate(
            flops=flops, transcendentals=0, bytes_accessed=bytes_accessed),
    )(*args)


# ----------------------------------------------------------------------------
# Reference + init
# ----------------------------------------------------------------------------
def init_params(key, latent_dim, hidden_dim, output_dim):
    """Deterministic synthetic init (shapes match nn.Linear layers of MLP2)."""
    dims = [(3, latent_dim), (latent_dim, hidden_dim),
            (hidden_dim, hidden_dim), (hidden_dim, output_dim)]
    params = {}
    keys = jax.random.split(key, 2 * len(dims))
    for i, (din, dout) in enumerate(dims):
        bound = 1.0 / jnp.sqrt(jnp.float32(din))
        params[f"w{i}"] = jax.random.uniform(
            keys[2 * i], (din, dout), jnp.float32, -bound, bound)
        params[f"b{i}"] = jax.random.uniform(
            keys[2 * i + 1], (1, dout), jnp.float32, -bound, bound)
    return params


def mlp2_reference(x, params):
    """Pure-JAX reference matching the PyTorch op order exactly."""
    z = jnp.einsum("bnd,dl->bnl", x, params["w0"]) + params["b0"]
    zm = jnp.mean(z, axis=1)
    h = jnp.maximum(zm @ params["w1"] + params["b1"], 0.0)
    h = jnp.maximum(h @ params["w2"] + params["b2"], 0.0)
    return h @ params["w3"] + params["b3"]


if __name__ == "__main__":
    key = jax.random.PRNGKey(0)
    kx1, kx2, kx3, kp = jax.random.split(key, 4)

    latent_dim, hidden_dim, output_dim = 32, 32, 16
    params = init_params(kp, latent_dim, hidden_dim, output_dim)

    # 1) Tiny shape straight from the module spec: single tile, no masking,
    #    no padding, no cast.
    x1 = jax.random.normal(kx1, (2, 8, 3), jnp.float32)
    out1 = jax.block_until_ready(mlp2_forward(x1, params))
    ref1 = mlp2_reference(x1, params)
    assert out1.shape == (2, output_dim)
    assert jnp.allclose(out1, ref1, atol=1e-4, rtol=1e-4), "f32 mismatch (tiny)"

    # 2) Ragged streaming grid: N-tiles of 128 with a 44-point tail handled by
    #    the in-kernel lane mask (no host-side padding of x).
    x2 = jax.random.normal(kx2, (3, 300, 3), jnp.float32)
    out2 = jax.block_until_ready(mlp2_forward(x2, params, block_n=128))
    ref2 = mlp2_reference(x2, params)
    assert out2.shape == (3, output_dim)
    assert jnp.allclose(out2, ref2, atol=1e-4, rtol=1e-4), \
        "f32 mismatch (ragged N)"

    # 3) B large enough to split the 'parallel' axis into >=2 blocks (both v7x
    #    TensorCores busy) with a ragged trailing B block (dropped OOB writes).
    x3 = jax.random.normal(kx3, (20, 256, 3), jnp.float32)
    out3 = jax.block_until_ready(mlp2_forward(x3, params))
    ref3 = mlp2_reference(x3, params)
    assert out3.shape == (20, output_dim)
    assert jnp.allclose(out3, ref3, atol=1e-4, rtol=1e-4), \
        "f32 mismatch (ragged B / megacore split)"

    # 4) bf16-at-source streaming: x already lives in bf16, so it is streamed
    #    as bf16 (half the HBM bytes) with f32 accumulation — no wrapper cast.
    x4 = x2.astype(jnp.bfloat16)
    out4 = jax.block_until_ready(mlp2_forward(x4, params, block_n=128))
    ref4 = mlp2_reference(x4.astype(jnp.float32), params)
    assert out4.shape == (3, output_dim)
    assert jnp.allclose(out4, ref4, atol=2e-2, rtol=2e-2), "bf16 mismatch"

    print("KERNEL_OK")
</pallas_src>

<mosaic_0001>
module attributes {stable_mosaic.version = 11 : i64} {
  func.func @_mlp2_kernel(%arg0: i32, %arg1: i32, %arg2: memref<2x24xf32, #tpu.memory_space<vmem>>, %arg3: memref<24x32xf32, #tpu.memory_space<vmem>>, %arg4: memref<1x32xf32, #tpu.memory_space<vmem>>, %arg5: memref<32x32xf32, #tpu.memory_space<vmem>>, %arg6: memref<1x32xf32, #tpu.memory_space<vmem>>, %arg7: memref<32x32xf32, #tpu.memory_space<vmem>>, %arg8: memref<1x32xf32, #tpu.memory_space<vmem>>, %arg9: memref<32x16xf32, #tpu.memory_space<vmem>>, %arg10: memref<1x16xf32, #tpu.memory_space<vmem>>, %arg11: memref<2x16xf32, #tpu.memory_space<vmem>>, %arg12: memref<2x32xf32, #tpu.memory_space<vmem>>) attributes {dimension_semantics = [#tpu.dimension_semantics<parallel>, #tpu.dimension_semantics<arbitrary>], iteration_bounds = array<i64: 1, 1>, scalar_prefetch = 0 : i64, scratch_operands = 1 : i64, tpu.core_type = #tpu.core_type<tc>, window_params = [{transform_indices = @transform_0, window_bounds = array<i64: 2, 24>}, {pipeline_mode = #tpu.pipeline_mode<synchronous>, transform_indices = @transform_1, window_bounds = array<i64: 24, 32>}, {pipeline_mode = #tpu.pipeline_mode<synchronous>, transform_indices = @transform_2, window_bounds = array<i64: 1, 32>}, {pipeline_mode = #tpu.pipeline_mode<synchronous>, transform_indices = @transform_3, window_bounds = array<i64: 32, 32>}, {pipeline_mode = #tpu.pipeline_mode<synchronous>, transform_indices = @transform_4, window_bounds = array<i64: 1, 32>}, {pipeline_mode = #tpu.pipeline_mode<synchronous>, transform_indices = @transform_5, window_bounds = array<i64: 32, 32>}, {pipeline_mode = #tpu.pipeline_mode<synchronous>, transform_indices = @transform_6, window_bounds = array<i64: 1, 32>}, {pipeline_mode = #tpu.pipeline_mode<synchronous>, transform_indices = @transform_7, window_bounds = array<i64: 32, 16>}, {pipeline_mode = #tpu.pipeline_mode<synchronous>, transform_indices = @transform_8, window_bounds = array<i64: 1, 16>}, {transform_indices = @transform_9, window_bounds = array<i64: 2, 16>}]} {
    %c0_i32 = arith.constant 0 : i32
    %0 = arith.cmpi eq, %arg1, %c0_i32 : i32
    %1 = arith.extui %0 : i1 to i32
    %c0_i32_0 = arith.constant 0 : i32
    %2 = arith.cmpi ne, %1, %c0_i32_0 : i32
    scf.if %2 {
      %cst_10 = arith.constant 0.000000e+00 : f32
      %12 = vector.broadcast %cst_10 : f32 to vector<2x32xf32>
      %c0_11 = arith.constant 0 : index
      %c0_12 = arith.constant 0 : index
      %13 = vector.load %arg12[%c0_11, %c0_12] : memref<2x32xf32, #tpu.memory_space<vmem>>, vector<2x32xf32>
      tpu.vector_store %arg12[%c0_11, %c0_12], %12 {strides = array<i32>} : memref<2x32xf32, #tpu.memory_space<vmem>>, vector<2x32xf32>,
    } else {
    }
    %c0 = arith.constant 0 : index
    %c0_1 = arith.constant 0 : index
    %3 = vector.load %arg2[%c0, %c0_1] : memref<2x24xf32, #tpu.memory_space<vmem>>, vector<2x24xf32>
    %c0_2 = arith.constant 0 : index
    %c0_3 = arith.constant 0 : index
    %4 = vector.load %arg12[%c0_2, %c0_3] : memref<2x32xf32, #tpu.memory_space<vmem>>, vector<2x32xf32>
    %c0_4 = arith.constant 0 : index
    %c0_5 = arith.constant 0 : index
    %5 = vector.load %arg3[%c0_4, %c0_5] : memref<24x32xf32, #tpu.memory_space<vmem>>, vector<24x32xf32>
    %cst = arith.constant dense<0.000000e+00> : vector<2x32xf32>
    %6 = tpu.matmul %3, %5, %cst {dimension_numbers = #tpu.dot_dimension_numbers<[1], [0], [0], [1], [0, 0, 1, 1], [], []>} : vector<2x24xf32>, vector<24x32xf32>, vector<2x32xf32> -> vector<2x32xf32>
    %7 = arith.addf %4, %6 : vector<2x32xf32>
    %c0_6 = arith.constant 0 : index
    %c0_7 = arith.constant 0 : index
    %8 = vector.load %arg12[%c0_6, %c0_7] : memref<2x32xf32, #tpu.memory_space<vmem>>, vector<2x32xf32>
    tpu.vector_store %arg12[%c0_6, %c0_7], %7 {strides = array<i32>} : memref<2x32xf32, #tpu.memory_space<vmem>>, vector<2x32xf32>,
    %c0_i32_8 = arith.constant 0 : i32
    %9 = arith.cmpi eq, %arg1, %c0_i32_8 : i32
    %10 = arith.extui %9 : i1 to i32
    %c0_i32_9 = arith.constant 0 : i32
    %11 = arith.cmpi ne, %10, %c0_i32_9 : i32
    scf.if %11 {
      %c0_10 = arith.constant 0 : index
      %c0_11 = arith.constant 0 : index
      %12 = vector.load %arg12[%c0_10, %c0_11] : memref<2x32xf32, #tpu.memory_space<vmem>>, vector<2x32xf32>
      %cst_12 = arith.constant 1.250000e-01 : f32
      %13 = vector.broadcast %cst_12 : f32 to vector<2x32xf32>
      %14 = arith.mulf %12, %13 : vector<2x32xf32>
      %c0_13 = arith.constant 0 : index
      %c0_14 = arith.constant 0 : index
      %15 = vector.load %arg4[%c0_13, %c0_14] : memref<1x32xf32, #tpu.memory_space<vmem>>, vector<1x32xf32>
      %16 = vector.broadcast %15 : vector<1x32xf32> to vector<2x32xf32>
      %17 = arith.addf %14, %16 : vector<2x32xf32>
      %c0_15 = arith.constant 0 : index
      %c0_16 = arith.constant 0 : index
      %18 = vector.load %arg5[%c0_15, %c0_16] : memref<32x32xf32, #tpu.memory_space<vmem>>, vector<32x32xf32>
      %cst_17 = arith.constant dense<0.000000e+00> : vector<2x32xf32>
      %19 = tpu.matmul %17, %18, %cst_17 {dimension_numbers = #tpu.dot_dimension_numbers<[1], [0], [0], [1], [0, 0, 1, 1], [], []>} : vector<2x32xf32>, vector<32x32xf32>, vector<2x32xf32> -> vector<2x32xf32>
      %c0_18 = arith.constant 0 : index
      %c0_19 = arith.constant 0 : index
      %20 = vector.load %arg6[%c0_18, %c0_19] : memref<1x32xf32, #tpu.memory_space<vmem>>, vector<1x32xf32>
      %21 = vector.broadcast %20 : vector<1x32xf32> to vector<2x32xf32>
      %22 = arith.addf %19, %21 : vector<2x32xf32>
      %cst_20 = arith.constant 0.000000e+00 : f32
      %23 = vector.broadcast %cst_20 : f32 to vector<2x32xf32>
      %24 = arith.maximumf %22, %23 : vector<2x32xf32>
      %c0_21 = arith.constant 0 : index
      %c0_22 = arith.constant 0 : index
      %25 = vector.load %arg7[%c0_21, %c0_22] : memref<32x32xf32, #tpu.memory_space<vmem>>, vector<32x32xf32>
      %cst_23 = arith.constant dense<0.000000e+00> : vector<2x32xf32>
      %26 = tpu.matmul %24, %25, %cst_23 {dimension_numbers = #tpu.dot_dimension_numbers<[1], [0], [0], [1], [0, 0, 1, 1], [], []>} : vector<2x32xf32>, vector<32x32xf32>, vector<2x32xf32> -> vector<2x32xf32>
      %c0_24 = arith.constant 0 : index
      %c0_25 = arith.constant 0 : index
      %27 = vector.load %arg8[%c0_24, %c0_25] : memref<1x32xf32, #tpu.memory_space<vmem>>, vector<1x32xf32>
      %28 = vector.broadcast %27 : vector<1x32xf32> to vector<2x32xf32>
      %29 = arith.addf %26, %28 : vector<2x32xf32>
      %cst_26 = arith.constant 0.000000e+00 : f32
      %30 = vector.broadcast %cst_26 : f32 to vector<2x32xf32>
      %31 = arith.maximumf %29, %30 : vector<2x32xf32>
      %c0_27 = arith.constant 0 : index
      %c0_28 = arith.constant 0 : index
      %32 = vector.load %arg9[%c0_27, %c0_28] : memref<32x16xf32, #tpu.memory_space<vmem>>, vector<32x16xf32>
      %cst_29 = arith.constant dense<0.000000e+00> : vector<2x16xf32>
      %33 = tpu.matmul %31, %32, %cst_29 {dimension_numbers = #tpu.dot_dimension_numbers<[1], [0], [0], [1], [0, 0, 1, 1], [], []>} : vector<2x32xf32>, vector<32x16xf32>, vector<2x16xf32> -> vector<2x16xf32>
      %c0_30 = arith.constant 0 : index
      %c0_31 = arith.constant 0 : index
      %34 = vector.load %arg10[%c0_30, %c0_31] : memref<1x16xf32, #tpu.memory_space<vmem>>, vector<1x16xf32>
      %35 = vector.broadcast %34 : vector<1x16xf32> to vector<2x16xf32>
      %36 = arith.addf %33, %35 : vector<2x16xf32>
      %c0_32 = arith.constant 0 : index
      %c0_33 = arith.constant 0 : index
      %37 = vector.load %arg11[%c0_32, %c0_33] : memref<2x16xf32, #tpu.memory_space<vmem>>, vector<2x16xf32>
      tpu.vector_store %arg11[%c0_32, %c0_33], %36 {strides = array<i32>} : memref<2x16xf32, #tpu.memory_space<vmem>>, vector<2x16xf32>,
    } else {
    }
    return
  }
  func.func @transform_0(%arg0: i32, %arg1: i32) -> (i32, i32) {
    %c0_i32 = arith.constant 0 : i32
    return %arg0, %arg1 : i32, i32
  }
  func.func @transform_1(%arg0: i32, %arg1: i32) -> (i32, i32) {
    %c0_i32 = arith.constant 0 : i32
    %c0_i32_0 = arith.constant 0 : i32
    %c0_i32_1 = arith.constant 0 : i32
    return %c0_i32, %c0_i32_0 : i32, i32
  }
  func.func @transform_2(%arg0: i32, %arg1: i32) -> (i32, i32) {
    %c0_i32 = arith.constant 0 : i32
    %c0_i32_0 = arith.constant 0 : i32
    %c0_i32_1 = arith.constant 0 : i32
    return %c0_i32, %c0_i32_0 : i32, i32
  }
  func.func @transform_3(%arg0: i32, %arg1: i32) -> (i32, i32) {
    %c0_i32 = arith.constant 0 : i32
    %c0_i32_0 = arith.constant 0 : i32
    %c0_i32_1 = arith.constant 0 : i32
    return %c0_i32, %c0_i32_0 : i32, i32
  }
  func.func @transform_4(%arg0: i32, %arg1: i32) -> (i32, i32) {
    %c0_i32 = arith.constant 0 : i32
    %c0_i32_0 = arith.constant 0 : i32
    %c0_i32_1 = arith.constant 0 : i32
    return %c0_i32, %c0_i32_0 : i32, i32
  }
  func.func @transform_5(%arg0: i32, %arg1: i32) -> (i32, i32) {
    %c0_i32 = arith.constant 0 : i32
    %c0_i32_0 = arith.constant 0 : i32
    %c0_i32_1 = arith.constant 0 : i32
    return %c0_i32, %c0_i32_0 : i32, i32
  }
  func.func @transform_6(%arg0: i32, %arg1: i32) -> (i32, i32) {
    %c0_i32 = arith.constant 0 : i32
    %c0_i32_0 = arith.constant 0 : i32
    %c0_i32_1 = arith.constant 0 : i32
    return %c0_i32, %c0_i32_0 : i32, i32
  }
  func.func @transform_7(%arg0: i32, %arg1: i32) -> (i32, i32) {
    %c0_i32 = arith.constant 0 : i32
    %c0_i32_0 = arith.constant 0 : i32
    %c0_i32_1 = arith.constant 0 : i32
    return %c0_i32, %c0_i32_0 : i32, i32
  }
  func.func @transform_8(%arg0: i32, %arg1: i32) -> (i32, i32) {
    %c0_i32 = arith.constant 0 : i32
    %c0_i32_0 = arith.constant 0 : i32
    %c0_i32_1 = arith.constant 0 : i32
    return %c0_i32, %c0_i32_0 : i32, i32
  }
  func.func @transform_9(%arg0: i32, %arg1: i32) -> (i32, i32) {
    %c0_i32 = arith.constant 0 : i32
    %c0_i32_0 = arith.constant 0 : i32
    return %arg0, %c0_i32 : i32, i32
  }
}

</mosaic_0001>

<llo_original>
// kernel: tpu_custom_call.1
$region0: #{tpu_custom_call.1}
  #allocation0 [shape = 'u32[]', space=smem, size = 0x4, offset = 0x4, fixed_abs, tag = 'smem constant byte address 0x4 - core index']
  #allocation1 [shape = 'u32[144,128]{1,0:T(1,128)}', space=vmem, size = 0x12000, scoped, tag = 'internal scratch']
  #allocation2 [shape = 'f32[2,32]{1,0:T(2,128)}', space=vmem, size = 0x400, scoped, tag = 'scratch operand']
  %s0 = inlined_call_operand.vmem [shape: f32[2,24], index: 0, kind: input, shape index: {}]
  %s1 = inlined_call_operand.hbm [shape: f32[24,32], index: 1, kind: input, shape index: {}]
  %s2 = inlined_call_operand.vmem [shape: f32[1,32], index: 2, kind: input, shape index: {}]
  %s3 = inlined_call_operand.vmem [shape: f32[32,32], index: 3, kind: input, shape index: {}]
  %s4 = inlined_call_operand.vmem [shape: f32[1,32], index: 4, kind: input, shape index: {}]
  %s5 = inlined_call_operand.hbm [shape: f32[32,32], index: 5, kind: input, shape index: {}]
  %s6 = inlined_call_operand.vmem [shape: f32[1,32], index: 6, kind: input, shape index: {}]
  %s7 = inlined_call_operand.vmem [shape: f32[32,16], index: 7, kind: input, shape index: {}]
  %s8 = inlined_call_operand.vmem [shape: f32[1,16], index: 8, kind: input, shape index: {}]
  %s9 = inlined_call_operand.hbm [shape: f32[2,16], index: 9, kind: output, shape index: {}]
  %s10 = sld [smem:[#allocation0]]
  $region62: #{tpu_custom_call.1} parent=0
    _
  %s12 = ssub.s32 1, %s10
  %s13 = scalar_select 0, %s12, %s10
  $region1: #{tpu_custom_call.1} parent=0
    #allocation3 [shape = 'u8[12288]{0}', space=vmem, size = 0x3000, scoped, tag = 'input window, operand 1, single buffered']
    #allocation4 [shape = 's32[1]{0}', space=sflag, size = 0x4, scoped, tag = 'scoped memory for tpu_custom_call.1']
    #allocation5 [shape = 's32[1]{0}', space=sflag, size = 0x4, scoped, tag = 'scoped memory for tpu_custom_call.1']
    #allocation6 [shape = 'u8[16384]{0}', space=vmem, size = 0x4000, scoped, tag = 'input window, operand 5, single buffered']
    #allocation7 [shape = 's32[1]{0}', space=sflag, size = 0x4, scoped, tag = 'scoped memory for tpu_custom_call.1']
    #allocation8 [shape = 'u8[1024]{0}', space=vmem, size = 0x400, scoped, tag = 'output window, operand 0, single buffered']
    %14 = vsyncpa [#allocation4], 0
    %15 = vsyncpa [#allocation7], 0
    %16 = vsyncpa [#allocation5], 0
    // Predicated region
    $region2: #{tpu_custom_call.1} parent=1 // pred_check
      _
    $region3: #{tpu_custom_call.1} parent=1 // pred_check_branch
      %18 = sbr.rel (0) target = $region5
    $region4: #{tpu_custom_call.1} parent=1 // pred_region
      _
    $region5: #{tpu_custom_call.1} parent=1 // pred_fallthru
      _
    // Predicated region
    $region6: #{tpu_custom_call.1} parent=1 // pred_check
      _
    $region7: #{tpu_custom_call.1} parent=1 // pred_check_branch
      %20 = sbr.rel (0) target = $region9
    $region8: #{tpu_custom_call.1} parent=1 // pred_region
      %s22 = ssub.s32 384, 384
      %23 = vsyncadd [#allocation4], %s22
      %s24 = sshll.u32 [#allocation3], 4
      %s25 = int_to_ptr.vmem [resolvable:$true] %s24
      %30 = dma.hbm_to_vmem [thread:$0]  %s1, 384, %s25, [#allocation4], 128, 128, 8
    $region9: #{tpu_custom_call.1} parent=1 // pred_fallthru
      _
    // Predicated region
    $region10: #{tpu_custom_call.1} parent=1 // pred_check
      _
    $region11: #{tpu_custom_call.1} parent=1 // pred_check_branch
      %32 = sbr.rel (0) target = $region13
    $region12: #{tpu_custom_call.1} parent=1 // pred_region
      _
    $region13: #{tpu_custom_call.1} parent=1 // pred_fallthru
      _
    // Predicated region
    $region14: #{tpu_custom_call.1} parent=1 // pred_check
      _
    $region15: #{tpu_custom_call.1} parent=1 // pred_check_branch
      %34 = sbr.rel (0) target = $region17
    $region16: #{tpu_custom_call.1} parent=1 // pred_region
      _
    $region17: #{tpu_custom_call.1} parent=1 // pred_fallthru
      _
    // Predicated region
    $region18: #{tpu_custom_call.1} parent=1 // pred_check
      _
    $region19: #{tpu_custom_call.1} parent=1 // pred_check_branch
      %36 = sbr.rel (0) target = $region21
    $region20: #{tpu_custom_call.1} parent=1 // pred_region
      _
    $region21: #{tpu_custom_call.1} parent=1 // pred_fallthru
      _
    // Predicated region
    $region22: #{tpu_custom_call.1} parent=1 // pred_check
      _
    $region23: #{tpu_custom_call.1} parent=1 // pred_check_branch
      %38 = sbr.rel (0) target = $region25
    $region24: #{tpu_custom_call.1} parent=1 // pred_region
      %s40 = ssub.s32 512, 512
      %41 = vsyncadd [#allocation7], %s40
      %s42 = sshll.u32 [#allocation6], 4
      %s43 = int_to_ptr.vmem [resolvable:$true] %s42
      %48 = dma.hbm_to_vmem [thread:$0]  %s5, 512, %s43, [#allocation7], 128, 128, 8
    $region25: #{tpu_custom_call.1} parent=1 // pred_fallthru
      _
    // Predicated region
    $region26: #{tpu_custom_call.1} parent=1 // pred_check
      _
    $region27: #{tpu_custom_call.1} parent=1 // pred_check_branch
      %50 = sbr.rel (0) target = $region29
    $region28: #{tpu_custom_call.1} parent=1 // pred_region
      _
    $region29: #{tpu_custom_call.1} parent=1 // pred_fallthru
      _
    // Predicated region
    $region30: #{tpu_custom_call.1} parent=1 // pred_check
      _
    $region31: #{tpu_custom_call.1} parent=1 // pred_check_branch
      %52 = sbr.rel (0) target = $region33
    $region32: #{tpu_custom_call.1} parent=1 // pred_region
      _
    $region33: #{tpu_custom_call.1} parent=1 // pred_fallthru
      _
    // Predicated region
    $region34: #{tpu_custom_call.1} parent=1 // pred_check
      _
    $region35: #{tpu_custom_call.1} parent=1 // pred_check_branch
      %54 = sbr.rel (0) target = $region37
    $region36: #{tpu_custom_call.1} parent=1 // pred_region
      _
    $region37: #{tpu_custom_call.1} parent=1 // pred_fallthru
      _
    // Predicated region
    $region38: #{tpu_custom_call.1} parent=1 // pred_check
      _
    $region39: #{tpu_custom_call.1} parent=1 // pred_check_branch
      %56 = sbr.rel (0) target = $region41
    $region40: #{tpu_custom_call.1} parent=1 // pred_region
      %57 = dma.done [#allocation4], 384
    $region41: #{tpu_custom_call.1} parent=1 // pred_fallthru
      _
    // Predicated region
    $region42: #{tpu_custom_call.1} parent=1 // pred_check
      _
    $region43: #{tpu_custom_call.1} parent=1 // pred_check_branch
      %59 = sbr.rel (0) target = $region45
    $region44: #{tpu_custom_call.1} parent=1 // pred_region
      %60 = dma.done [#allocation7], 512
    $region45: #{tpu_custom_call.1} parent=1 // pred_fallthru
      _
    %p61 = scmp.eq.s32.totalorder 0, 0
    // Predicated region
    $region46: #{tpu_custom_call.1} parent=1 // pred_check
      %p62 = pneg %p61
    $region47: #{tpu_custom_call.1} parent=1 // pred_check_branch
      %64 = sbr.rel (%p62) target = $region49
    $region48: #{tpu_custom_call.1} parent=1 // pred_region
      %vm65 = vcmask 254976
      %66 = vst.msk [vmem:[#allocation2] sm:$0x3] %vm65, 0.0
    $region49: #{tpu_custom_call.1} parent=1 // pred_fallthru
      _
    %v67 = vld [vmem:[%s0] sm:$0x3]
    %v68 = vld [vmem:[#allocation2] sm:$0x3]
    %v69 = vld [vmem:[#allocation3] sm:$0xff]
    %v70 = vld [vmem:[#allocation3 + $0x8] sm:$0xff]
    %v71 = vld [vmem:[#allocation3 + $0x10] sm:$0xff]
    %vm72 = vcmask 195584
    %v74 = vsel %vm72, %v67, 0
    %76 = vmatprep.subr.mxu0 0.0
    %77 = vmatpush1.msra.mxu0 0.0
    %78 = vmatprep.subr.mxu0 0.0
    %79 = vmatpush1.msra.mxu0 0.0
    %80 = vmatprep.subr.mxu0 0.0
    %81 = vmatpush1.msra.mxu0 0.0
    %82 = vmatprep.subr.mxu0 0.0
    %83 = vmatpush1.msra.mxu0 0.0
    %84 = vmatprep.subr.mxu0 0.0
    %85 = vmatpush1.msra.mxu0 0.0
    %86 = vmatprep.subr.mxu0 0.0
    %87 = vmatpush1.msra.mxu0 0.0
    %88 = vmatprep.subr.mxu0 0.0
    %89 = vmatpush1.msra.mxu0 0.0
    %90 = vmatprep.subr.mxu0 0.0
    %91 = vmatpush1.msra.mxu0 0.0
    %92 = vmatprep.subr.mxu0 0.0
    %93 = vmatpush1.msra.mxu0 0.0
    %94 = vmatprep.subr.mxu0 0.0
    %95 = vmatpush1.msra.mxu0 0.0
    %96 = vmatprep.subr.mxu0 0.0
    %97 = vmatpush1.msra.mxu0 0.0
    %98 = vmatprep.subr.mxu0 0.0
    %99 = vmatpush1.msra.mxu0 0.0
    %100 = vmatprep.subr.mxu0 0.0
    %101 = vmatpush1.msra.mxu0 0.0
    %102 = vmatprep.subr.mxu0 0.0
    %103 = vmatpush1.msra.mxu0 %v71
    %104 = vmatprep.subr.mxu0 0.0
    %105 = vmatpush1.msra.mxu0 %v70
    %106 = vmatprep.subr.mxu0 0.0
    %107 = vmatpush1.msra.mxu0 %v69
    %108 = vmatprep.subr.mxu0 0.0
    %109 = vmatpush2.msra.mxu0 0.0
    %110 = vmatprep.subr.mxu0 0.0
    %111 = vmatpush2.msra.mxu0 0.0
    %112 = vmatprep.subr.mxu0 0.0
    %113 = vmatpush2.msra.mxu0 0.0
    %114 = vmatprep.subr.mxu0 0.0
    %115 = vmatpush2.msra.mxu0 0.0
    %116 = vmatprep.subr.mxu0 0.0
    %117 = vmatpush2.msra.mxu0 0.0
    %118 = vmatprep.subr.mxu0 0.0
    %119 = vmatpush2.msra.mxu0 0.0
    %120 = vmatprep.subr.mxu0 0.0
    %121 = vmatpush2.msra.mxu0 0.0
    %122 = vmatprep.subr.mxu0 0.0
    %123 = vmatpush2.msra.mxu0 0.0
    %124 = vmatprep.subr.mxu0 0.0
    %125 = vmatpush2.msra.mxu0 0.0
    %126 = vmatprep.subr.mxu0 0.0
    %127 = vmatpush2.msra.mxu0 0.0
    %128 = vmatprep.subr.mxu0 0.0
    %129 = vmatpush2.msra.mxu0 0.0
    %130 = vmatprep.subr.mxu0 0.0
    %131 = vmatpush2.msra.mxu0 0.0
    %132 = vmatprep.subr.mxu0 0.0
    %133 = vmatpush2.msra.mxu0 0.0
    %134 = vmatprep.subr.mxu0 0.0
    %135 = vmatpush2.msra.mxu0 0.0
    %136 = vmatprep.subr.mxu0 0.0
    %137 = vmatpush2.msra.mxu0 0.0
    %138 = vmatprep.subr.mxu0 0.0
    %139 = vmatpush2.msra.mxu0 0.0
    %140 = vmatprep.mubr.f32.mxu0 0.0
    %141 = vmatmul.mubr.f32.gmra.mxu0 %v74
    %v142 = vpop.f32.mrf.mxu0
    %v143 = vadd.f32 0.0, %v142
    %v144 = vpop.f32.mrf.mxu0
    %145 = vdwg.mxu0
    %v146 = vadd.f32 %v68, %v143
    %vm147 = vcmask 254976
    %148 = vst.msk [vmem:[#allocation2] sm:$0x3] %vm147, %v146
    // Predicated region
    $region50: #{tpu_custom_call.1} parent=1 // pred_check
      %p149 = pneg %p61
    $region51: #{tpu_custom_call.1} parent=1 // pred_check_branch
      %151 = sbr.rel (%p149) target = $region53
    $region52: #{tpu_custom_call.1} parent=1 // pred_region
      %v152 = vld [vmem:[#allocation2] sm:$0x3]
      %v153 = vmul.f32 %v152, 0.125
      %v154 = vld [vmem:[%s2] sm:$0x1]
      %v156 = vlaneseq
      %v157 = vshrl.u32 %v156, 7
      %v158 = vsub.s32 0, %v157
      %v159 = vrot.slane %v154, %v158
      %v161 = vadd.f32 %v153, %v159
      %v162 = vld [vmem:[%s3] sm:$0xff]
      %v163 = vld [vmem:[%s3 + $0x8] sm:$0xff]
      %v164 = vld [vmem:[%s3 + $0x10] sm:$0xff]
      %v165 = vld [vmem:[%s3 + $0x18] sm:$0xff]
      %v166 = vld [vmem:[%s4] sm:$0x1]
      %v168 = vlaneseq
      %v169 = vshrl.u32 %v168, 7
      %v170 = vsub.s32 0, %v169
      %v171 = vrot.slane %v166, %v170
      %vm173 = vcmask 261120
      %v175 = vsel %vm173, %v161, 0
      %177 = vmatprep.subr.mxu0 0.0
      %178 = vmatpush1.msra.mxu0 0.0
      %179 = vmatprep.subr.mxu0 0.0
      %180 = vmatpush1.msra.mxu0 0.0
      %181 = vmatprep.subr.mxu0 0.0
      %182 = vmatpush1.msra.mxu0 0.0
      %183 = vmatprep.subr.mxu0 0.0
      %184 = vmatpush1.msra.mxu0 0.0
      %185 = vmatprep.subr.mxu0 0.0
      %186 = vmatpush1.msra.mxu0 0.0
      %187 = vmatprep.subr.mxu0 0.0
      %188 = vmatpush1.msra.mxu0 0.0
      %189 = vmatprep.subr.mxu0 0.0
      %190 = vmatpush1.msra.mxu0 0.0
      %191 = vmatprep.subr.mxu0 0.0
      %192 = vmatpush1.msra.mxu0 0.0
      %193 = vmatprep.subr.mxu0 0.0
      %194 = vmatpush1.msra.mxu0 0.0
      %195 = vmatprep.subr.mxu0 0.0
      %196 = vmatpush1.msra.mxu0 0.0
      %197 = vmatprep.subr.mxu0 0.0
      %198 = vmatpush1.msra.mxu0 0.0
      %199 = vmatprep.subr.mxu0 0.0
      %200 = vmatpush1.msra.mxu0 0.0
      %201 = vmatprep.subr.mxu0 0.0
      %202 = vmatpush1.msra.mxu0 %v165
      %203 = vmatprep.subr.mxu0 0.0
      %204 = vmatpush1.msra.mxu0 %v164
      %205 = vmatprep.subr.mxu0 0.0
      %206 = vmatpush1.msra.mxu0 %v163
      %207 = vmatprep.subr.mxu0 0.0
      %208 = vmatpush1.msra.mxu0 %v162
      %209 = vmatprep.subr.mxu0 0.0
      %210 = vmatpush2.msra.mxu0 0.0
      %211 = vmatprep.subr.mxu0 0.0
      %212 = vmatpush2.msra.mxu0 0.0
      %213 = vmatprep.subr.mxu0 0.0
      %214 = vmatpush2.msra.mxu0 0.0
      %215 = vmatprep.subr.mxu0 0.0
      %216 = vmatpush2.msra.mxu0 0.0
      %217 = vmatprep.subr.mxu0 0.0
      %218 = vmatpush2.msra.mxu0 0.0
      %219 = vmatprep.subr.mxu0 0.0
      %220 = vmatpush2.msra.mxu0 0.0
      %221 = vmatprep.subr.mxu0 0.0
      %222 = vmatpush2.msra.mxu0 0.0
      %223 = vmatprep.subr.mxu0 0.0
      %224 = vmatpush2.msra.mxu0 0.0
      %225 = vmatprep.subr.mxu0 0.0
      %226 = vmatpush2.msra.mxu0 0.0
      %227 = vmatprep.subr.mxu0 0.0
      %228 = vmatpush2.msra.mxu0 0.0
      %229 = vmatprep.subr.mxu0 0.0
      %230 = vmatpush2.msra.mxu0 0.0
      %231 = vmatprep.subr.mxu0 0.0
      %232 = vmatpush2.msra.mxu0 0.0
      %233 = vmatprep.subr.mxu0 0.0
      %234 = vmatpush2.msra.mxu0 0.0
      %235 = vmatprep.subr.mxu0 0.0
      %236 = vmatpush2.msra.mxu0 0.0
      %237 = vmatprep.subr.mxu0 0.0
      %238 = vmatpush2.msra.mxu0 0.0
      %239 = vmatprep.subr.mxu0 0.0
      %240 = vmatpush2.msra.mxu0 0.0
      %241 = vmatprep.mubr.f32.mxu0 0.0
      %242 = vmatmul.mubr.f32.gmra.mxu0 %v175
      %v243 = vpop.f32.mrf.mxu0
      %v244 = vadd.f32 %v171, %v243
      %v245 = vpop.f32.mrf.mxu0
      %246 = vdwg.mxu0
      %v247 = vmax.f32 %v244, 0.0
      %v248 = vld [vmem:[#allocation6] sm:$0xff]
      %v249 = vld [vmem:[#allocation6 + $0x8] sm:$0xff]
      %v250 = vld [vmem:[#allocation6 + $0x10] sm:$0xff]
      %v251 = vld [vmem:[#allocation6 + $0x18] sm:$0xff]
      %v252 = vld [vmem:[%s6] sm:$0x1]
      %v254 = vlaneseq
      %v255 = vshrl.u32 %v254, 7
      %v256 = vsub.s32 0, %v255
      %v257 = vrot.slane %v252, %v256
      %v260 = vsel %vm173, %v247, 0
      %262 = vmatprep.subr.mxu0 0.0
      %263 = vmatpush1.msra.mxu0 0.0
      %264 = vmatprep.subr.mxu0 0.0
      %265 = vmatpush1.msra.mxu0 0.0
      %266 = vmatprep.subr.mxu0 0.0
      %267 = vmatpush1.msra.mxu0 0.0
      %268 = vmatprep.subr.mxu0 0.0
      %269 = vmatpush1.msra.mxu0 0.0
      %270 = vmatprep.subr.mxu0 0.0
      %271 = vmatpush1.msra.mxu0 0.0
      %272 = vmatprep.subr.mxu0 0.0
      %273 = vmatpush1.msra.mxu0 0.0
      %274 = vmatprep.subr.mxu0 0.0
      %275 = vmatpush1.msra.mxu0 0.0
      %276 = vmatprep.subr.mxu0 0.0
      %277 = vmatpush1.msra.mxu0 0.0
      %278 = vmatprep.subr.mxu0 0.0
      %279 = vmatpush1.msra.mxu0 0.0
      %280 = vmatprep.subr.mxu0 0.0
      %281 = vmatpush1.msra.mxu0 0.0
      %282 = vmatprep.subr.mxu0 0.0
      %283 = vmatpush1.msra.mxu0 0.0
      %284 = vmatprep.subr.mxu0 0.0
      %285 = vmatpush1.msra.mxu0 0.0
      %286 = vmatprep.subr.mxu0 0.0
      %287 = vmatpush1.msra.mxu0 %v251
      %288 = vmatprep.subr.mxu0 0.0
      %289 = vmatpush1.msra.mxu0 %v250
      %290 = vmatprep.subr.mxu0 0.0
      %291 = vmatpush1.msra.mxu0 %v249
      %292 = vmatprep.subr.mxu0 0.0
      %293 = vmatpush1.msra.mxu0 %v248
      %294 = vmatprep.subr.mxu0 0.0
      %295 = vmatpush2.msra.mxu0 0.0
      %296 = vmatprep.subr.mxu0 0.0
      %297 = vmatpush2.msra.mxu0 0.0
      %298 = vmatprep.subr.mxu0 0.0
      %299 = vmatpush2.msra.mxu0 0.0
      %300 = vmatprep.subr.mxu0 0.0
      %301 = vmatpush2.msra.mxu0 0.0
      %302 = vmatprep.subr.mxu0 0.0
      %303 = vmatpush2.msra.mxu0 0.0
      %304 = vmatprep.subr.mxu0 0.0
      %305 = vmatpush2.msra.mxu0 0.0
      %306 = vmatprep.subr.mxu0 0.0
      %307 = vmatpush2.msra.mxu0 0.0
      %308 = vmatprep.subr.mxu0 0.0
      %309 = vmatpush2.msra.mxu0 0.0
      %310 = vmatprep.subr.mxu0 0.0
      %311 = vmatpush2.msra.mxu0 0.0
      %312 = vmatprep.subr.mxu0 0.0
      %313 = vmatpush2.msra.mxu0 0.0
      %314 = vmatprep.subr.mxu0 0.0
      %315 = vmatpush2.msra.mxu0 0.0
      %316 = vmatprep.subr.mxu0 0.0
      %317 = vmatpush2.msra.mxu0 0.0
      %318 = vmatprep.subr.mxu0 0.0
      %319 = vmatpush2.msra.mxu0 0.0
      %320 = vmatprep.subr.mxu0 0.0
      %321 = vmatpush2.msra.mxu0 0.0
      %322 = vmatprep.subr.mxu0 0.0
      %323 = vmatpush2.msra.mxu0 0.0
      %324 = vmatprep.subr.mxu0 0.0
      %325 = vmatpush2.msra.mxu0 0.0
      %326 = vmatprep.mubr.f32.mxu0 0.0
      %327 = vmatmul.mubr.f32.gmra.mxu0 %v260
      %v328 = vpop.f32.mrf.mxu0
      %v329 = vadd.f32 %v257, %v328
      %v330 = vpop.f32.mrf.mxu0
      %331 = vdwg.mxu0
      %v332 = vmax.f32 %v329, 0.0
      %v333 = vld [vmem:[%s7] sm:$0xff]
      %v334 = vld [vmem:[%s7 + $0x8] sm:$0xff]
      %v335 = vld [vmem:[%s7 + $0x10] sm:$0xff]
      %v336 = vld [vmem:[%s7 + $0x18] sm:$0xff]
      %v337 = vld [vmem:[%s8] sm:$0x1]
      %v339 = vlaneseq
      %v340 = vshrl.u32 %v339, 7
      %v341 = vsub.s32 0, %v340
      %v342 = vrot.slane %v337, %v341
      %v345 = vsel %vm173, %v332, 0
      %347 = vmatprep.subr.mxu0 0.0
      %348 = vmatpush1.msra.mxu0 0.0
      %349 = vmatprep.subr.mxu0 0.0
      %350 = vmatpush1.msra.mxu0 0.0
      %351 = vmatprep.subr.mxu0 0.0
      %352 = vmatpush1.msra.mxu0 0.0
      %353 = vmatprep.subr.mxu0 0.0
      %354 = vmatpush1.msra.mxu0 0.0
      %355 = vmatprep.subr.mxu0 0.0
      %356 = vmatpush1.msra.mxu0 0.0
      %357 = vmatprep.subr.mxu0 0.0
      %358 = vmatpush1.msra.mxu0 0.0
      %359 = vmatprep.subr.mxu0 0.0
      %360 = vmatpush1.msra.mxu0 0.0
      %361 = vmatprep.subr.mxu0 0.0
      %362 = vmatpush1.msra.mxu0 0.0
      %363 = vmatprep.subr.mxu0 0.0
      %364 = vmatpush1.msra.mxu0 0.0
      %365 = vmatprep.subr.mxu0 0.0
      %366 = vmatpush1.msra.mxu0 0.0
      %367 = vmatprep.subr.mxu0 0.0
      %368 = vmatpush1.msra.mxu0 0.0
      %369 = vmatprep.subr.mxu0 0.0
      %370 = vmatpush1.msra.mxu0 0.0
      %371 = vmatprep.subr.mxu0 0.0
      %372 = vmatpush1.msra.mxu0 %v336
      %373 = vmatprep.subr.mxu0 0.0
      %374 = vmatpush1.msra.mxu0 %v335
      %375 = vmatprep.subr.mxu0 0.0
      %376 = vmatpush1.msra.mxu0 %v334
      %377 = vmatprep.subr.mxu0 0.0
      %378 = vmatpush1.msra.mxu0 %v333
      %379 = vmatprep.subr.mxu0 0.0
      %380 = vmatpush2.msra.mxu0 0.0
      %381 = vmatprep.subr.mxu0 0.0
      %382 = vmatpush2.msra.mxu0 0.0
      %383 = vmatprep.subr.mxu0 0.0
      %384 = vmatpush2.msra.mxu0 0.0
      %385 = vmatprep.subr.mxu0 0.0
      %386 = vmatpush2.msra.mxu0 0.0
      %387 = vmatprep.subr.mxu0 0.0
      %388 = vmatpush2.msra.mxu0 0.0
      %389 = vmatprep.subr.mxu0 0.0
      %390 = vmatpush2.msra.mxu0 0.0
      %391 = vmatprep.subr.mxu0 0.0
      %392 = vmatpush2.msra.mxu0 0.0
      %393 = vmatprep.subr.mxu0 0.0
      %394 = vmatpush2.msra.mxu0 0.0
      %395 = vmatprep.subr.mxu0 0.0
      %396 = vmatpush2.msra.mxu0 0.0
      %397 = vmatprep.subr.mxu0 0.0
      %398 = vmatpush2.msra.mxu0 0.0
      %399 = vmatprep.subr.mxu0 0.0
      %400 = vmatpush2.msra.mxu0 0.0
      %401 = vmatprep.subr.mxu0 0.0
      %402 = vmatpush2.msra.mxu0 0.0
      %403 = vmatprep.subr.mxu0 0.0
      %404 = vmatpush2.msra.mxu0 0.0
      %405 = vmatprep.subr.mxu0 0.0
      %406 = vmatpush2.msra.mxu0 0.0
      %407 = vmatprep.subr.mxu0 0.0
      %408 = vmatpush2.msra.mxu0 0.0
      %409 = vmatprep.subr.mxu0 0.0
      %410 = vmatpush2.msra.mxu0 0.0
      %411 = vmatprep.mubr.f32.mxu0 0.0
      %412 = vmatmul.mubr.f32.gmra.mxu0 %v345
      %v413 = vpop.f32.mrf.mxu0
      %v414 = vadd.f32 %v342, %v413
      %v415 = vpop.f32.mrf.mxu0
      %416 = vdwg.mxu0
      %vm417 = vcmask 123904
      %418 = vst.msk [vmem:[#allocation8] sm:$0x3] %vm417, %v414
    $region53: #{tpu_custom_call.1} parent=1 // pred_fallthru
      _
    // Predicated region
    $region54: #{tpu_custom_call.1} parent=1 // pred_check
      _
    $region55: #{tpu_custom_call.1} parent=1 // pred_check_branch
      %420 = sbr.rel (0) target = $region57
    $region56: #{tpu_custom_call.1} parent=1 // pred_region
      %s422 = ssub.s32 32, 32
      %423 = vsyncadd [#allocation5], %s422
      %s425 = sshll.u32 [#allocation8], 4
      %s426 = int_to_ptr.vmem [resolvable:$true] %s425
      %428 = dma.vmem_to_hbm [thread:$0]  %s426, 32, %s9, [#allocation5]
    $region57: #{tpu_custom_call.1} parent=1 // pred_fallthru
      _
    // Predicated region
    $region58: #{tpu_custom_call.1} parent=1 // pred_check
      _
    $region59: #{tpu_custom_call.1} parent=1 // pred_check_branch
      %430 = sbr.rel (0) target = $region61
    $region60: #{tpu_custom_call.1} parent=1 // pred_region
      %431 = dma.done [#allocation5], 32
    $region61: #{tpu_custom_call.1} parent=1 // pred_fallthru
      _
    %432 = vsyncpa [#allocation4], 1
    %433 = vsyncpa [#allocation7], 1
    %434 = vsyncpa [#allocation5], 1

</llo_original>
